<compile_context>
chip_gen: v7x
topology: tpu7x:2x2x1
jax: 0.10.0
libtpu: 0.0.40
codegen_flags: <defaults>
</compile_context>

<pallas_src>
import functools

import jax
import jax.numpy as jnp
from jax import lax
from jax.experimental import pallas as pl
from jax.experimental.pallas import tpu as pltpu


def _round_up(x, m):
    return (x + m - 1) // m * m


_VMEM_LIMIT = 64 * 1024 * 1024          # <= physical VMEM on every chip incl. v7x
_RESIDENT_BUDGET = 40 * 1024 * 1024     # headroom vs v7x 64 MiB / TC


# ---- Kernel B, fast path: full `unit` resident, 1-D grid over column tiles ----
def _colmax_resident(unit, c_cls, c_pad, d_pad, bc, n_blk, mask_rows,
                     operand_bytes):
    def kernel(unit_all_ref, unit_col_ref, colmax_ref):
        j = pl.program_id(0)
        # cos[r, c] = <unit[r], unit[j*bc + c]>   (MXU, f32 accumulate)
        cos = lax.dot_general(
            unit_all_ref[...], unit_col_ref[...],
            dimension_numbers=(((1,), (1,)), ((), ())),
            preferred_element_type=jnp.float32,
        )                                                    # (c_pad, bc)
        gr = lax.broadcasted_iota(jnp.int32, (c_pad, bc), 0)             # global row
        gc = j * bc + lax.broadcasted_iota(jnp.int32, (c_pad, bc), 1)    # global col
        # Negate the diagonal (do NOT hard-code -1: zero-norm rows have 0).
        cos = jnp.where(gr == gc, -cos, cos)
        if mask_rows:
            # Padded *rows* must not contribute to valid columns' maxima
            # (their cosine is 0, which could beat a genuinely negative max).
            cos = jnp.where(gr < c_cls, cos, -2.0)
        colmax_ref[...] = jnp.max(cos, axis=0, keepdims=True)            # lane-dense

    return pl.pallas_call(
        kernel,
        out_shape=jax.ShapeDtypeStruct((1, c_pad), jnp.float32),
        grid_spec=pltpu.PrefetchScalarGridSpec(
            num_scalar_prefetch=0,
            grid=(n_blk,),
            in_specs=[
                pl.BlockSpec((c_pad, d_pad), lambda j: (0, 0)),   # resident operand
                pl.BlockSpec((bc, d_pad), lambda j: (j, 0)),      # column tile
            ],
            out_specs=pl.BlockSpec((1, bc), lambda j: (0, j)),
        ),
        compiler_params=pltpu.CompilerParams(
            dimension_semantics=("parallel",),
            vmem_limit_bytes=_VMEM_LIMIT,
        ),
        cost_estimate=pl.CostEstimate(
            flops=2 * c_pad * c_pad * d_pad,
            transcendentals=0,
            bytes_accessed=2 * c_pad * d_pad * operand_bytes + c_pad * 4,
        ),
    )(unit, unit)


# ---- Kernel B, fallback: 2-D tiled accumulation (large C*D) -------------------
def _colmax_tiled(unit, c_cls, c_pad, d_pad, bc, n_blk, mask_rows,
                  operand_bytes):
    def kernel(unit_i_ref, unit_j_ref, rowmax_ref):
        j = pl.program_id(0)   # output-column tile (parallel)
        i = pl.program_id(1)   # reduction tile over rows (arbitrary, last)

        @pl.when(i == 0)
        def _init():
            # Cosines live in [-1, 1]; -2 never wins the max.
            rowmax_ref[...] = jnp.full((1, bc), -2.0, dtype=jnp.float32)

        cos = lax.dot_general(
            unit_i_ref[...], unit_j_ref[...],
            dimension_numbers=(((1,), (1,)), ((), ())),
            preferred_element_type=jnp.float32,
        )

        if mask_rows:
            gi = i * bc + lax.broadcasted_iota(jnp.int32, (bc, 1), 0)
            cos = jnp.where(gi < c_cls, cos, -2.0)

        def _acc(c):
            blk_max = jnp.max(c, axis=0, keepdims=True)      # (1, bc), lane-dense
            rowmax_ref[...] = jnp.maximum(rowmax_ref[...], blk_max)

        @pl.when(i == j)
        def _diag_tile():
            rr = lax.broadcasted_iota(jnp.int32, (bc, bc), 0)
            cc = lax.broadcasted_iota(jnp.int32, (bc, bc), 1)
            _acc(jnp.where(rr == cc, -cos, cos))

        @pl.when(i != j)
        def _off_diag_tile():
            _acc(cos)

    return pl.pallas_call(
        kernel,
        out_shape=jax.ShapeDtypeStruct((1, c_pad), jnp.float32),
        grid_spec=pltpu.PrefetchScalarGridSpec(
            num_scalar_prefetch=0,
            grid=(n_blk, n_blk),                      # (j, i); i iterates fastest
            in_specs=[
                pl.BlockSpec((bc, d_pad), lambda j, i: (i, 0)),   # row operand
                pl.BlockSpec((bc, d_pad), lambda j, i: (j, 0)),   # column operand
            ],
            out_specs=pl.BlockSpec((1, bc), lambda j, i: (0, j)),  # resident over i
        ),
        compiler_params=pltpu.CompilerParams(
            dimension_semantics=("parallel", "arbitrary"),
            vmem_limit_bytes=_VMEM_LIMIT,
        ),
        cost_estimate=pl.CostEstimate(
            flops=2 * c_pad * c_pad * d_pad,
            transcendentals=0,
            bytes_accessed=(n_blk + 1) * c_pad * d_pad * operand_bytes + c_pad * 4,
        ),
    )(unit, unit)


def nc2_loss(means, max_resident_bytes=_RESIDENT_BUDGET):
    """Pallas implementation of NC2Loss.forward. Returns (loss, max_cosine)."""
    c_cls, d = means.shape

    # MXU-friendly padding: lanes (D) to a multiple of 128; classes to a
    # multiple of the class tile BC (128, or 256 once there is enough work).
    bc = 256 if c_cls > 256 else 128
    c_pad = _round_up(c_cls, bc)
    d_pad = _round_up(d, 128)
    n_blk = c_pad // bc
    mask_rows = c_pad > c_cls

    # bf16 operands hit the native MXU rate on v5e/v6e/v7x; normalization math
    # stays f32 (accumulation is f32 via preferred_element_type).
    operand_dtype = jnp.bfloat16 if means.dtype == jnp.bfloat16 else jnp.float32
    operand_bytes = jnp.dtype(operand_dtype).itemsize

    means_p = jnp.pad(means, ((0, c_pad - c_cls), (0, d_pad - d)))

    # ---- Kernel A: global-mean centering + per-row L2 normalization --------
    def _normalize_kernel(means_ref, unit_ref):
        m = means_ref[...].astype(jnp.float32)
        # Padded rows are zero, so sum / real_C is the true global mean.
        g_mean = jnp.sum(m, axis=0, keepdims=True) * (1.0 / float(c_cls))
        centered = m - g_mean
        if mask_rows:
            row = lax.broadcasted_iota(jnp.int32, (c_pad, 1), 0)
            centered = jnp.where(row < c_cls, centered, 0.0)
        # F.normalize(..., p=2, dim=1): x / max(||x||_2, 1e-12)
        norm = jnp.sqrt(jnp.sum(centered * centered, axis=1, keepdims=True))
        unit_ref[...] = (centered / jnp.maximum(norm, 1e-12)).astype(unit_ref.dtype)

    unit = pl.pallas_call(
        _normalize_kernel,
        out_shape=jax.ShapeDtypeStruct((c_pad, d_pad), operand_dtype),
        in_specs=[pl.BlockSpec((c_pad, d_pad), lambda: (0, 0))],
        out_specs=pl.BlockSpec((c_pad, d_pad), lambda: (0, 0)),
        compiler_params=pltpu.CompilerParams(vmem_limit_bytes=_VMEM_LIMIT),
    )(means_p)

    # ---- Kernel B: cosine matmul + per-column (== per-row) max -------------
    # Conservative VMEM estimate of the resident path (double-buffered inputs
    # plus the f32 cosine block and select temporaries).
    resident_bytes = (
        2 * c_pad * d_pad * operand_bytes      # full `unit` (worst-case 2 bufs)
        + 2 * bc * d_pad * operand_bytes       # column tiles (double-buffered)
        + 2 * c_pad * bc * 4                   # f32 cosine block + temporaries
        + 2 * bc * 4                           # output block
    )
    if resident_bytes <= max_resident_bytes:
        rowmax = _colmax_resident(unit, c_cls, c_pad, d_pad, bc, n_blk,
                                  mask_rows, operand_bytes)
    else:
        rowmax = _colmax_tiled(unit, c_cls, c_pad, d_pad, bc, n_blk,
                               mask_rows, operand_bytes)

    # ---- Tiny glue over C scalars -------------------------------------------
    row_max = jnp.clip(rowmax[0, :c_cls], -0.99999, 0.99999)
    loss = -jnp.mean(jnp.arccos(row_max))
    max_cosine = jnp.max(row_max)     # clip is monotone: == clip(global max)
    return loss, max_cosine


def _nc2_loss_ref(means):
    """Pure-JAX reference mirroring the PyTorch NC2Loss module."""
    means = means.astype(jnp.float32)
    g_mean = jnp.mean(means, axis=0)
    centered = means - g_mean
    norm = jnp.sqrt(jnp.sum(centered * centered, axis=1, keepdims=True))
    unit = centered / jnp.maximum(norm, 1e-12)
    cosine = unit @ unit.T
    cosine = cosine - 2.0 * jnp.diag(jnp.diag(cosine))
    max_cosine = jnp.clip(jnp.max(cosine), -0.99999, 0.99999)
    loss = -jnp.mean(jnp.arccos(jnp.clip(jnp.max(cosine, axis=1),
                                         -0.99999, 0.99999)))
    return loss, max_cosine


if __name__ == "__main__":
    key = jax.random.PRNGKey(0)
    k1, k2 = jax.random.split(key)

    # Small shape consistent with the module: means is (num_classes, feat_dim).
    means = jax.random.normal(k1, (8, 32), dtype=jnp.float32)
    loss, max_cos = jax.jit(nc2_loss)(means)
    jax.block_until_ready((loss, max_cos))
    ref_loss, ref_max = _nc2_loss_ref(means)
    assert jnp.allclose(loss, ref_loss, atol=1e-4), (loss, ref_loss)
    assert jnp.allclose(max_cos, ref_max, atol=1e-4), (max_cos, ref_max)

    # Second shape exercises the resident path with 2 column tiles, cross-tile
    # diagonals, and the padded-row boundary mask (C: 200 -> 256, D: 96 -> 128).
    means2 = jax.random.normal(k2, (200, 96), dtype=jnp.float32)
    loss2, max_cos2 = jax.jit(nc2_loss)(means2)
    jax.block_until_ready((loss2, max_cos2))
    ref_loss2, ref_max2 = _nc2_loss_ref(means2)
    assert jnp.allclose(loss2, ref_loss2, atol=1e-4), (loss2, ref_loss2)
    assert jnp.allclose(max_cos2, ref_max2, atol=1e-4), (max_cos2, ref_max2)

    # Third run forces the large-C*D fallback (2-D accumulating grid) so both
    # kernel-B variants are exercised on-device.
    tiled_fn = jax.jit(functools.partial(nc2_loss, max_resident_bytes=0))
    loss3, max_cos3 = tiled_fn(means2)
    jax.block_until_ready((loss3, max_cos3))
    assert jnp.allclose(loss3, ref_loss2, atol=1e-4), (loss3, ref_loss2)
    assert jnp.allclose(max_cos3, ref_max2, atol=1e-4), (max_cos3, ref_max2)

    print("KERNEL_OK")
</pallas_src>

<mosaic_0001>
module attributes {stable_mosaic.version = 11 : i64} {
  func.func @_normalize_kernel(%arg0: memref<128x128xf32, #tpu.memory_space<vmem>>, %arg1: memref<128x128xf32, #tpu.memory_space<vmem>>) attributes {dimension_semantics = [], scalar_prefetch = 0 : i64, scratch_operands = 0 : i64, tpu.core_type = #tpu.core_type<tc>} {
    %c0 = arith.constant 0 : index
    %c0_0 = arith.constant 0 : index
    %0 = vector.load %arg0[%c0, %c0_0] : memref<128x128xf32, #tpu.memory_space<vmem>>, vector<128x128xf32>
    %cst = arith.constant dense<0.000000e+00> : vector<128xf32>
    %1 = vector.multi_reduction <add>, %0, %cst [0] : vector<128x128xf32> to vector<128xf32>
    %2 = vector.shape_cast %1 : vector<128xf32> to vector<1x128xf32>
    %cst_1 = arith.constant 1.250000e-01 : f32
    %3 = vector.broadcast %cst_1 : f32 to vector<1x128xf32>
    %4 = arith.mulf %2, %3 : vector<1x128xf32>
    %5 = vector.broadcast %4 : vector<1x128xf32> to vector<128x128xf32>
    %6 = arith.subf %0, %5 : vector<128x128xf32>
    %7 = tpu.iota {dimensions = array<i32: 0>} : vector<128x1xi32>
    %c8_i32 = arith.constant 8 : i32
    %8 = vector.broadcast %c8_i32 : i32 to vector<128x1xi32>
    %9 = arith.cmpi slt, %7, %8 : vector<128x1xi32>
    %cst_2 = arith.constant 0.000000e+00 : f32
    %10 = vector.shape_cast %9 : vector<128x1xi1> to vector<128x1xi1>
    %11 = vector.broadcast %10 : vector<128x1xi1> to vector<128x128xi1>
    %12 = vector.broadcast %cst_2 : f32 to vector<128x128xf32>
    %13 = arith.select %11, %6, %12 : vector<128x128xi1>, vector<128x128xf32>
    %14 = arith.mulf %13, %13 : vector<128x128xf32>
    %cst_3 = arith.constant dense<0.000000e+00> : vector<128xf32>
    %15 = vector.multi_reduction <add>, %14, %cst_3 [1] : vector<128x128xf32> to vector<128xf32>
    %16 = vector.shape_cast %15 : vector<128xf32> to vector<128x1xf32>
    %17 = math.sqrt %16 : vector<128x1xf32>
    %cst_4 = arith.constant 9.99999996E-13 : f32
    %18 = vector.broadcast %cst_4 : f32 to vector<128x1xf32>
    %19 = arith.maximumf %17, %18 : vector<128x1xf32>
    %20 = vector.broadcast %19 : vector<128x1xf32> to vector<128x128xf32>
    %21 = arith.divf %13, %20 : vector<128x128xf32>
    %c0_5 = arith.constant 0 : index
    %c0_6 = arith.constant 0 : index
    %22 = vector.load %arg1[%c0_5, %c0_6] : memref<128x128xf32, #tpu.memory_space<vmem>>, vector<128x128xf32>
    tpu.vector_store %arg1[%c0_5, %c0_6], %21 {strides = array<i32>} : memref<128x128xf32, #tpu.memory_space<vmem>>, vector<128x128xf32>,
    return
  }
}

module attributes {stable_mosaic.version = 11 : i64} {
  func.func @kernel(%arg0: i32, %arg1: memref<128x128xf32, #tpu.memory_space<vmem>>, %arg2: memref<128x128xf32, #tpu.memory_space<vmem>>, %arg3: memref<1x128xf32, #tpu.memory_space<vmem>>) attributes {dimension_semantics = [#tpu.dimension_semantics<parallel>], iteration_bounds = array<i64: 1>, scalar_prefetch = 0 : i64, scratch_operands = 0 : i64, tpu.core_type = #tpu.core_type<tc>, window_params = [{pipeline_mode = #tpu.pipeline_mode<synchronous>, transform_indices = @transform_0, window_bounds = array<i64: 128, 128>}, {transform_indices = @transform_1, window_bounds = array<i64: 128, 128>}, {transform_indices = @transform_2, window_bounds = array<i64: 1, 128>}]} {
    %c0 = arith.constant 0 : index
    %c0_0 = arith.constant 0 : index
    %0 = vector.load %arg1[%c0, %c0_0] : memref<128x128xf32, #tpu.memory_space<vmem>>, vector<128x128xf32>
    %c0_1 = arith.constant 0 : index
    %c0_2 = arith.constant 0 : index
    %1 = vector.load %arg2[%c0_1, %c0_2] : memref<128x128xf32, #tpu.memory_space<vmem>>, vector<128x128xf32>
    %cst = arith.constant dense<0.000000e+00> : vector<128x128xf32>
    %2 = tpu.matmul %0, %1, %cst {dimension_numbers = #tpu.dot_dimension_numbers<[1], [1], [0], [0], [0, 0, 1, 0], [], []>} : vector<128x128xf32>, vector<128x128xf32>, vector<128x128xf32> -> vector<128x128xf32>
    %3 = tpu.iota {dimensions = array<i32: 0>} : vector<128x128xi32>
    %c128_i32 = arith.constant 128 : i32
    %4 = arith.muli %arg0, %c128_i32 : i32
    %5 = tpu.iota {dimensions = array<i32: 1>} : vector<128x128xi32>
    %6 = vector.broadcast %4 : i32 to vector<128x128xi32>
    %7 = arith.addi %6, %5 : vector<128x128xi32>
    %8 = arith.cmpi eq, %3, %7 : vector<128x128xi32>
    %cst_3 = arith.constant 0.000000e+00 : f32
    %9 = vector.broadcast %cst_3 : f32 to vector<128x128xf32>
    %10 = arith.subf %9, %2 : vector<128x128xf32>
    %11 = arith.select %8, %10, %2 : vector<128x128xi1>, vector<128x128xf32>
    %c8_i32 = arith.constant 8 : i32
    %12 = vector.broadcast %c8_i32 : i32 to vector<128x128xi32>
    %13 = arith.cmpi slt, %3, %12 : vector<128x128xi32>
    %cst_4 = arith.constant -2.000000e+00 : f32
    %14 = vector.broadcast %cst_4 : f32 to vector<128x128xf32>
    %15 = arith.select %13, %11, %14 : vector<128x128xi1>, vector<128x128xf32>
    %cst_5 = arith.constant dense<0xFF800000> : vector<128xf32>
    %16 = vector.multi_reduction <maximumf>, %15, %cst_5 [0] : vector<128x128xf32> to vector<128xf32>
    %17 = vector.shape_cast %16 : vector<128xf32> to vector<1x128xf32>
    %c0_6 = arith.constant 0 : index
    %c0_7 = arith.constant 0 : index
    %18 = vector.load %arg3[%c0_6, %c0_7] : memref<1x128xf32, #tpu.memory_space<vmem>>, vector<1x128xf32>
    tpu.vector_store %arg3[%c0_6, %c0_7], %17 {strides = array<i32>} : memref<1x128xf32, #tpu.memory_space<vmem>>, vector<1x128xf32>,
    return
  }
  func.func @transform_0(%arg0: i32) -> (i32, i32) {
    %c0_i32 = arith.constant 0 : i32
    %c0_i32_0 = arith.constant 0 : i32
    %c0_i32_1 = arith.constant 0 : i32
    return %c0_i32, %c0_i32_0 : i32, i32
  }
  func.func @transform_1(%arg0: i32) -> (i32, i32) {
    %c0_i32 = arith.constant 0 : i32
    %c0_i32_0 = arith.constant 0 : i32
    return %arg0, %c0_i32 : i32, i32
  }
  func.func @transform_2(%arg0: i32) -> (i32, i32) {
    %c0_i32 = arith.constant 0 : i32
    %c0_i32_0 = arith.constant 0 : i32
    return %c0_i32, %arg0 : i32, i32
  }
}

</mosaic_0001>

<llo_original>
// kernel: nc2_loss.2
$region0: #{nc2_loss.2}
  #allocation0 [shape = 'u32[]', space=smem, size = 0x4, offset = 0x4, fixed_abs, tag = 'smem constant byte address 0x4 - core index']
  #allocation1 [shape = 'u32[144,128]{1,0:T(1,128)}', space=vmem, size = 0x12000, scoped, tag = 'internal scratch']
  %s0 = inlined_call_operand.hbm [shape: f32[128,128], index: 0, kind: input, shape index: {}]
  %s1 = inlined_call_operand.hbm [shape: f32[128,128], index: 1, kind: output, shape index: {}]
  %s2 = sld [smem:[#allocation0]]
  $region18: #{nc2_loss.2} parent=0
    _
  %s4 = ssub.s32 1, %s2
  %s5 = scalar_select 0, %s4, %s2
  $region1: #{nc2_loss.2} parent=0
    #allocation2 [shape = 'u8[65536]{0}', space=vmem, size = 0x10000, scoped, tag = 'input window, operand 0, single buffered']
    #allocation3 [shape = 's32[1]{0}', space=sflag, size = 0x4, scoped, tag = 'scoped memory for nc2_loss.2']
    #allocation4 [shape = 's32[1]{0}', space=sflag, size = 0x4, scoped, tag = 'scoped memory for nc2_loss.2']
    #allocation5 [shape = 'u8[65536]{0}', space=vmem, size = 0x10000, scoped, tag = 'output window, operand 0, single buffered']
    %6 = vsyncpa [#allocation3], 0
    %7 = vsyncpa [#allocation4], 0
    // Predicated region
    $region2: #{nc2_loss.2} parent=1 // pred_check
      _
    $region3: #{nc2_loss.2} parent=1 // pred_check_branch
      %9 = sbr.rel (0) target = $region5
    $region4: #{nc2_loss.2} parent=1 // pred_region
      %s11 = ssub.s32 2048, 2048
      %12 = vsyncadd [#allocation3], %s11
      %s13 = sshll.u32 [#allocation2], 4
      %s14 = int_to_ptr.vmem [resolvable:$true] %s13
      %19 = dma.hbm_to_vmem [thread:$0]  %s0, 2048, %s14, [#allocation3], 128, 128, 8
    $region5: #{nc2_loss.2} parent=1 // pred_fallthru
      _
    // Predicated region
    $region6: #{nc2_loss.2} parent=1 // pred_check
      _
    $region7: #{nc2_loss.2} parent=1 // pred_check_branch
      %21 = sbr.rel (0) target = $region9
    $region8: #{nc2_loss.2} parent=1 // pred_region
      %22 = dma.done [#allocation3], 2048
    $region9: #{nc2_loss.2} parent=1 // pred_fallthru
      _
    %v23 = vld [vmem:[#allocation2] sm:$0xff]
    %v24 = vld [vmem:[#allocation2 + $0x8] sm:$0xff]
    %v25 = vld [vmem:[#allocation2 + $0x10] sm:$0xff]
    %v26 = vld [vmem:[#allocation2 + $0x18] sm:$0xff]
    %v27 = vld [vmem:[#allocation2 + $0x20] sm:$0xff]
    %v28 = vld [vmem:[#allocation2 + $0x28] sm:$0xff]
    %v29 = vld [vmem:[#allocation2 + $0x30] sm:$0xff]
    %v30 = vld [vmem:[#allocation2 + $0x38] sm:$0xff]
    %v31 = vld [vmem:[#allocation2 + $0x40] sm:$0xff]
    %v32 = vld [vmem:[#allocation2 + $0x48] sm:$0xff]
    %v33 = vld [vmem:[#allocation2 + $0x50] sm:$0xff]
    %v34 = vld [vmem:[#allocation2 + $0x58] sm:$0xff]
    %v35 = vld [vmem:[#allocation2 + $0x60] sm:$0xff]
    %v36 = vld [vmem:[#allocation2 + $0x68] sm:$0xff]
    %v37 = vld [vmem:[#allocation2 + $0x70] sm:$0xff]
    %v38 = vld [vmem:[#allocation2 + $0x78] sm:$0xff]
    %v39 = vadd.f32 %v23, %v24
    %v40 = vadd.f32 %v39, %v25
    %v41 = vadd.f32 %v40, %v26
    %v42 = vadd.f32 %v41, %v27
    %v43 = vadd.f32 %v42, %v28
    %v44 = vadd.f32 %v43, %v29
    %v45 = vadd.f32 %v44, %v30
    %v46 = vadd.f32 %v45, %v31
    %v47 = vadd.f32 %v46, %v32
    %v48 = vadd.f32 %v47, %v33
    %v49 = vadd.f32 %v48, %v34
    %v50 = vadd.f32 %v49, %v35
    %v51 = vadd.f32 %v50, %v36
    %v52 = vadd.f32 %v51, %v37
    %v53 = vadd.f32 %v52, %v38
    %v54 = vrot.slane %v53, 4
    %v55 = vadd.f32 %v53, %v54
    %v56 = vrot.slane %v55, 2
    %v57 = vadd.f32 %v55, %v56
    %v58 = vrot.slane %v57, 1
    %v59 = vadd.f32 %v57, %v58
    %v60 = vmul.f32 %v59, 0.125
    %v61 = vsub.f32 %v23, %v60
    %v62 = vsub.f32 %v24, %v60
    %v63 = vsub.f32 %v25, %v60
    %v64 = vsub.f32 %v26, %v60
    %v65 = vsub.f32 %v27, %v60
    %v66 = vsub.f32 %v28, %v60
    %v67 = vsub.f32 %v29, %v60
    %v68 = vsub.f32 %v30, %v60
    %v69 = vsub.f32 %v31, %v60
    %v70 = vsub.f32 %v32, %v60
    %v71 = vsub.f32 %v33, %v60
    %v72 = vsub.f32 %v34, %v60
    %v73 = vsub.f32 %v35, %v60
    %v74 = vsub.f32 %v36, %v60
    %v75 = vsub.f32 %v37, %v60
    %v76 = vsub.f32 %v38, %v60
    %v77 = vlaneseq
    %v78 = vshrl.u32 %v77, 7
    %v79 = vadd.s32 %v78, 8
    %v80 = vadd.s32 %v78, 16
    %v81 = vadd.s32 %v78, 24
    %v82 = vadd.s32 %v78, 32
    %v83 = vadd.s32 %v78, 40
    %v84 = vadd.s32 %v78, 48
    %v85 = vadd.s32 %v78, 56
    %v86 = vadd.s32 %v78, 64
    %v87 = vadd.s32 %v78, 72
    %v88 = vadd.s32 %v78, 80
    %v89 = vadd.s32 %v78, 88
    %v90 = vadd.s32 %v78, 96
    %v91 = vadd.s32 %v78, 104
    %v92 = vadd.s32 %v78, 112
    %v93 = vadd.s32 %v78, 120
    %vm94 = vcmp.lt.s32.totalorder %v78, 8
    %vm95 = vcmp.lt.s32.totalorder %v79, 8
    %vm96 = vcmp.lt.s32.totalorder %v80, 8
    %vm97 = vcmp.lt.s32.totalorder %v81, 8
    %vm98 = vcmp.lt.s32.totalorder %v82, 8
    %vm99 = vcmp.lt.s32.totalorder %v83, 8
    %vm100 = vcmp.lt.s32.totalorder %v84, 8
    %vm101 = vcmp.lt.s32.totalorder %v85, 8
    %vm102 = vcmp.lt.s32.totalorder %v86, 8
    %vm103 = vcmp.lt.s32.totalorder %v87, 8
    %vm104 = vcmp.lt.s32.totalorder %v88, 8
    %vm105 = vcmp.lt.s32.totalorder %v89, 8
    %vm106 = vcmp.lt.s32.totalorder %v90, 8
    %vm107 = vcmp.lt.s32.totalorder %v91, 8
    %vm108 = vcmp.lt.s32.totalorder %v92, 8
    %vm109 = vcmp.lt.s32.totalorder %v93, 8
    %v110 = vsel %vm94, 1, 0
    %v111 = vsel %vm95, 1, 0
    %v112 = vsel %vm96, 1, 0
    %v113 = vsel %vm97, 1, 0
    %v114 = vsel %vm98, 1, 0
    %v115 = vsel %vm99, 1, 0
    %v116 = vsel %vm100, 1, 0
    %v117 = vsel %vm101, 1, 0
    %v118 = vsel %vm102, 1, 0
    %v119 = vsel %vm103, 1, 0
    %v120 = vsel %vm104, 1, 0
    %v121 = vsel %vm105, 1, 0
    %v122 = vsel %vm106, 1, 0
    %v123 = vsel %vm107, 1, 0
    %v124 = vsel %vm108, 1, 0
    %v125 = vsel %vm109, 1, 0
    %vm126 = vcmp.eq.s32.totalorder %v110, 1
    %vm127 = vcmp.eq.s32.totalorder %v111, 1
    %vm128 = vcmp.eq.s32.totalorder %v112, 1
    %vm129 = vcmp.eq.s32.totalorder %v113, 1
    %vm130 = vcmp.eq.s32.totalorder %v114, 1
    %vm131 = vcmp.eq.s32.totalorder %v115, 1
    %vm132 = vcmp.eq.s32.totalorder %v116, 1
    %vm133 = vcmp.eq.s32.totalorder %v117, 1
    %vm134 = vcmp.eq.s32.totalorder %v118, 1
    %vm135 = vcmp.eq.s32.totalorder %v119, 1
    %vm136 = vcmp.eq.s32.totalorder %v120, 1
    %vm137 = vcmp.eq.s32.totalorder %v121, 1
    %vm138 = vcmp.eq.s32.totalorder %v122, 1
    %vm139 = vcmp.eq.s32.totalorder %v123, 1
    %vm140 = vcmp.eq.s32.totalorder %v124, 1
    %vm141 = vcmp.eq.s32.totalorder %v125, 1
    %v142 = vsel %vm126, %v61, 0.0
    %v143 = vsel %vm127, %v62, 0.0
    %v144 = vsel %vm128, %v63, 0.0
    %v145 = vsel %vm129, %v64, 0.0
    %v146 = vsel %vm130, %v65, 0.0
    %v147 = vsel %vm131, %v66, 0.0
    %v148 = vsel %vm132, %v67, 0.0
    %v149 = vsel %vm133, %v68, 0.0
    %v150 = vsel %vm134, %v69, 0.0
    %v151 = vsel %vm135, %v70, 0.0
    %v152 = vsel %vm136, %v71, 0.0
    %v153 = vsel %vm137, %v72, 0.0
    %v154 = vsel %vm138, %v73, 0.0
    %v155 = vsel %vm139, %v74, 0.0
    %v156 = vsel %vm140, %v75, 0.0
    %v157 = vsel %vm141, %v76, 0.0
    %v158 = vmul.f32 %v142, %v142
    %v159 = vmul.f32 %v143, %v143
    %v160 = vmul.f32 %v144, %v144
    %v161 = vmul.f32 %v145, %v145
    %v162 = vmul.f32 %v146, %v146
    %v163 = vmul.f32 %v147, %v147
    %v164 = vmul.f32 %v148, %v148
    %v165 = vmul.f32 %v149, %v149
    %v166 = vmul.f32 %v150, %v150
    %v167 = vmul.f32 %v151, %v151
    %v168 = vmul.f32 %v152, %v152
    %v169 = vmul.f32 %v153, %v153
    %v170 = vmul.f32 %v154, %v154
    %v171 = vmul.f32 %v155, %v155
    %v172 = vmul.f32 %v156, %v156
    %v173 = vmul.f32 %v157, %v157
    %174 = vadd.xlane.f32.xlu0 %v158
    %v175 = vpop.xlane.xlu0 %174
    %176 = vadd.xlane.f32.xlu0 %v159
    %v177 = vpop.xlane.xlu0 %176
    %178 = vadd.xlane.f32.xlu0 %v160
    %v179 = vpop.xlane.xlu0 %178
    %180 = vadd.xlane.f32.xlu0 %v161
    %v181 = vpop.xlane.xlu0 %180
    %182 = vadd.xlane.f32.xlu0 %v162
    %v183 = vpop.xlane.xlu0 %182
    %184 = vadd.xlane.f32.xlu0 %v163
    %v185 = vpop.xlane.xlu0 %184
    %186 = vadd.xlane.f32.xlu0 %v164
    %v187 = vpop.xlane.xlu0 %186
    %188 = vadd.xlane.f32.xlu0 %v165
    %v189 = vpop.xlane.xlu0 %188
    %190 = vadd.xlane.f32.xlu0 %v166
    %v191 = vpop.xlane.xlu0 %190
    %192 = vadd.xlane.f32.xlu0 %v167
    %v193 = vpop.xlane.xlu0 %192
    %194 = vadd.xlane.f32.xlu0 %v168
    %v195 = vpop.xlane.xlu0 %194
    %196 = vadd.xlane.f32.xlu0 %v169
    %v197 = vpop.xlane.xlu0 %196
    %198 = vadd.xlane.f32.xlu0 %v170
    %v199 = vpop.xlane.xlu0 %198
    %200 = vadd.xlane.f32.xlu0 %v171
    %v201 = vpop.xlane.xlu0 %200
    %202 = vadd.xlane.f32.xlu0 %v172
    %v203 = vpop.xlane.xlu0 %202
    %204 = vadd.xlane.f32.xlu0 %v173
    %v205 = vpop.xlane.xlu0 %204
    %v206 = vrsqrt.pop %v175
    %v207 = vmul.f32 %v175, %v206
    %vm208 = vcmp.eq.f32.partialorder %v175, inf
    %v209 = vsel %vm208, %v175, %v207
    %vm210 = vcmp.eq.f32.partialorder %v175, 0.0
    %v211 = vand.u32 %v175, 2147483648
    %v212 = vsel %vm210, %v211, %v209
    %v213 = vrsqrt.pop %v177
    %v214 = vmul.f32 %v177, %v213
    %vm215 = vcmp.eq.f32.partialorder %v177, inf
    %v216 = vsel %vm215, %v177, %v214
    %vm217 = vcmp.eq.f32.partialorder %v177, 0.0
    %v218 = vand.u32 %v177, 2147483648
    %v219 = vsel %vm217, %v218, %v216
    %v220 = vrsqrt.pop %v179
    %v221 = vmul.f32 %v179, %v220
    %vm222 = vcmp.eq.f32.partialorder %v179, inf
    %v223 = vsel %vm222, %v179, %v221
    %vm224 = vcmp.eq.f32.partialorder %v179, 0.0
    %v225 = vand.u32 %v179, 2147483648
    %v226 = vsel %vm224, %v225, %v223
    %v227 = vrsqrt.pop %v181
    %v228 = vmul.f32 %v181, %v227
    %vm229 = vcmp.eq.f32.partialorder %v181, inf
    %v230 = vsel %vm229, %v181, %v228
    %vm231 = vcmp.eq.f32.partialorder %v181, 0.0
    %v232 = vand.u32 %v181, 2147483648
    %v233 = vsel %vm231, %v232, %v230
    %v234 = vrsqrt.pop %v183
    %v235 = vmul.f32 %v183, %v234
    %vm236 = vcmp.eq.f32.partialorder %v183, inf
    %v237 = vsel %vm236, %v183, %v235
    %vm238 = vcmp.eq.f32.partialorder %v183, 0.0
    %v239 = vand.u32 %v183, 2147483648
    %v240 = vsel %vm238, %v239, %v237
    %v241 = vrsqrt.pop %v185
    %v242 = vmul.f32 %v185, %v241
    %vm243 = vcmp.eq.f32.partialorder %v185, inf
    %v244 = vsel %vm243, %v185, %v242
    %vm245 = vcmp.eq.f32.partialorder %v185, 0.0
    %v246 = vand.u32 %v185, 2147483648
    %v247 = vsel %vm245, %v246, %v244
    %v248 = vrsqrt.pop %v187
    %v249 = vmul.f32 %v187, %v248
    %vm250 = vcmp.eq.f32.partialorder %v187, inf
    %v251 = vsel %vm250, %v187, %v249
    %vm252 = vcmp.eq.f32.partialorder %v187, 0.0
    %v253 = vand.u32 %v187, 2147483648
    %v254 = vsel %vm252, %v253, %v251
    %v255 = vrsqrt.pop %v189
    %v256 = vmul.f32 %v189, %v255
    %vm257 = vcmp.eq.f32.partialorder %v189, inf
    %v258 = vsel %vm257, %v189, %v256
    %vm259 = vcmp.eq.f32.partialorder %v189, 0.0
    %v260 = vand.u32 %v189, 2147483648
    %v261 = vsel %vm259, %v260, %v258
    %v262 = vrsqrt.pop %v191
    %v263 = vmul.f32 %v191, %v262
    %vm264 = vcmp.eq.f32.partialorder %v191, inf
    %v265 = vsel %vm264, %v191, %v263
    %vm266 = vcmp.eq.f32.partialorder %v191, 0.0
    %v267 = vand.u32 %v191, 2147483648
    %v268 = vsel %vm266, %v267, %v265
    %v269 = vrsqrt.pop %v193
    %v270 = vmul.f32 %v193, %v269
    %vm271 = vcmp.eq.f32.partialorder %v193, inf
    %v272 = vsel %vm271, %v193, %v270
    %vm273 = vcmp.eq.f32.partialorder %v193, 0.0
    %v274 = vand.u32 %v193, 2147483648
    %v275 = vsel %vm273, %v274, %v272
    %v276 = vrsqrt.pop %v195
    %v277 = vmul.f32 %v195, %v276
    %vm278 = vcmp.eq.f32.partialorder %v195, inf
    %v279 = vsel %vm278, %v195, %v277
    %vm280 = vcmp.eq.f32.partialorder %v195, 0.0
    %v281 = vand.u32 %v195, 2147483648
    %v282 = vsel %vm280, %v281, %v279
    %v283 = vrsqrt.pop %v197
    %v284 = vmul.f32 %v197, %v283
    %vm285 = vcmp.eq.f32.partialorder %v197, inf
    %v286 = vsel %vm285, %v197, %v284
    %vm287 = vcmp.eq.f32.partialorder %v197, 0.0
    %v288 = vand.u32 %v197, 2147483648
    %v289 = vsel %vm287, %v288, %v286
    %v290 = vrsqrt.pop %v199
    %v291 = vmul.f32 %v199, %v290
    %vm292 = vcmp.eq.f32.partialorder %v199, inf
    %v293 = vsel %vm292, %v199, %v291
    %vm294 = vcmp.eq.f32.partialorder %v199, 0.0
    %v295 = vand.u32 %v199, 2147483648
    %v296 = vsel %vm294, %v295, %v293
    %v297 = vrsqrt.pop %v201
    %v298 = vmul.f32 %v201, %v297
    %vm299 = vcmp.eq.f32.partialorder %v201, inf
    %v300 = vsel %vm299, %v201, %v298
    %vm301 = vcmp.eq.f32.partialorder %v201, 0.0
    %v302 = vand.u32 %v201, 2147483648
    %v303 = vsel %vm301, %v302, %v300
    %v304 = vrsqrt.pop %v203
    %v305 = vmul.f32 %v203, %v304
    %vm306 = vcmp.eq.f32.partialorder %v203, inf
    %v307 = vsel %vm306, %v203, %v305
    %vm308 = vcmp.eq.f32.partialorder %v203, 0.0
    %v309 = vand.u32 %v203, 2147483648
    %v310 = vsel %vm308, %v309, %v307
    %v311 = vrsqrt.pop %v205
    %v312 = vmul.f32 %v205, %v311
    %vm313 = vcmp.eq.f32.partialorder %v205, inf
    %v314 = vsel %vm313, %v205, %v312
    %vm315 = vcmp.eq.f32.partialorder %v205, 0.0
    %v316 = vand.u32 %v205, 2147483648
    %v317 = vsel %vm315, %v316, %v314
    %v318 = vmax.f32 %v212, 1e-12
    %v319 = vmax.f32 %v219, 1e-12
    %v320 = vmax.f32 %v226, 1e-12
    %v321 = vmax.f32 %v233, 1e-12
    %v322 = vmax.f32 %v240, 1e-12
    %v323 = vmax.f32 %v247, 1e-12
    %v324 = vmax.f32 %v254, 1e-12
    %v325 = vmax.f32 %v261, 1e-12
    %v326 = vmax.f32 %v268, 1e-12
    %v327 = vmax.f32 %v275, 1e-12
    %v328 = vmax.f32 %v282, 1e-12
    %v329 = vmax.f32 %v289, 1e-12
    %v330 = vmax.f32 %v296, 1e-12
    %v331 = vmax.f32 %v303, 1e-12
    %v332 = vmax.f32 %v310, 1e-12
    %v333 = vmax.f32 %v317, 1e-12
    %v334 = vrcp.pop %v318
    %v335 = vmul.f32 %v142, %v334
    %v336 = vrcp.pop %v319
    %v337 = vmul.f32 %v143, %v336
    %v338 = vrcp.pop %v320
    %v339 = vmul.f32 %v144, %v338
    %v340 = vrcp.pop %v321
    %v341 = vmul.f32 %v145, %v340
    %v342 = vrcp.pop %v322
    %v343 = vmul.f32 %v146, %v342
    %v344 = vrcp.pop %v323
    %v345 = vmul.f32 %v147, %v344
    %v346 = vrcp.pop %v324
    %v347 = vmul.f32 %v148, %v346
    %v348 = vrcp.pop %v325
    %v349 = vmul.f32 %v149, %v348
    %v350 = vrcp.pop %v326
    %v351 = vmul.f32 %v150, %v350
    %v352 = vrcp.pop %v327
    %v353 = vmul.f32 %v151, %v352
    %v354 = vrcp.pop %v328
    %v355 = vmul.f32 %v152, %v354
    %v356 = vrcp.pop %v329
    %v357 = vmul.f32 %v153, %v356
    %v358 = vrcp.pop %v330
    %v359 = vmul.f32 %v154, %v358
    %v360 = vrcp.pop %v331
    %v361 = vmul.f32 %v155, %v360
    %v362 = vrcp.pop %v332
    %v363 = vmul.f32 %v156, %v362
    %v364 = vrcp.pop %v333
    %v365 = vmul.f32 %v157, %v364
    %366 = vst [vmem:[#allocation5] sm:$0xff] %v335
    %367 = vst [vmem:[#allocation5 + $0x8] sm:$0xff] %v337
    %368 = vst [vmem:[#allocation5 + $0x10] sm:$0xff] %v339
    %369 = vst [vmem:[#allocation5 + $0x18] sm:$0xff] %v341
    %370 = vst [vmem:[#allocation5 + $0x20] sm:$0xff] %v343
    %371 = vst [vmem:[#allocation5 + $0x28] sm:$0xff] %v345
    %372 = vst [vmem:[#allocation5 + $0x30] sm:$0xff] %v347
    %373 = vst [vmem:[#allocation5 + $0x38] sm:$0xff] %v349
    %374 = vst [vmem:[#allocation5 + $0x40] sm:$0xff] %v351
    %375 = vst [vmem:[#allocation5 + $0x48] sm:$0xff] %v353
    %376 = vst [vmem:[#allocation5 + $0x50] sm:$0xff] %v355
    %377 = vst [vmem:[#allocation5 + $0x58] sm:$0xff] %v357
    %378 = vst [vmem:[#allocation5 + $0x60] sm:$0xff] %v359
    %379 = vst [vmem:[#allocation5 + $0x68] sm:$0xff] %v361
    %380 = vst [vmem:[#allocation5 + $0x70] sm:$0xff] %v363
    %381 = vst [vmem:[#allocation5 + $0x78] sm:$0xff] %v365
    // Predicated region
    $region10: #{nc2_loss.2} parent=1 // pred_check
      _
    $region11: #{nc2_loss.2} parent=1 // pred_check_branch
      %383 = sbr.rel (0) target = $region13
    $region12: #{nc2_loss.2} parent=1 // pred_region
      %s385 = ssub.s32 2048, 2048
      %386 = vsyncadd [#allocation4], %s385
      %s387 = sshll.u32 [#allocation5], 4
      %s388 = int_to_ptr.vmem [resolvable:$true] %s387
      %393 = dma.vmem_to_hbm [thread:$0]  %s388, 2048, %s1, [#allocation4], 128, 128, 8
    $region13: #{nc2_loss.2} parent=1 // pred_fallthru
      _
    // Predicated region
    $region14: #{nc2_loss.2} parent=1 // pred_check
      _
    $region15: #{nc2_loss.2} parent=1 // pred_check_branch
      %395 = sbr.rel (0) target = $region17
    $region16: #{nc2_loss.2} parent=1 // pred_region
      %396 = dma.done [#allocation4], 2048
    $region17: #{nc2_loss.2} parent=1 // pred_fallthru
      _
    %397 = vsyncpa [#allocation3], 1
    %398 = vsyncpa [#allocation4], 1

// kernel: nc2_loss.3
$region0: #{nc2_loss.3}
  #allocation0 [shape = 'u32[]', space=smem, size = 0x4, offset = 0x4, fixed_abs, tag = 'smem constant byte address 0x4 - core index']
  #allocation1 [shape = 'u32[144,128]{1,0:T(1,128)}', space=vmem, size = 0x12000, scoped, tag = 'internal scratch']
  %s0 = inlined_call_operand.hbm [shape: f32[128,128], index: 0, kind: input, shape index: {}, may-alias: {0,1}]
  %s1 = inlined_call_operand.hbm [shape: f32[128,128], index: 1, kind: input, shape index: {}, may-alias: {0,1}]
  %s2 = inlined_call_operand.hbm [shape: f32[1,128], index: 2, kind: output, shape index: {}]
  %s3 = sld [smem:[#allocation0]]
  $region26: #{nc2_loss.3} parent=0
    _
  %s5 = ssub.s32 1, %s3
  %s6 = scalar_select 0, %s5, %s3
  $region1: #{nc2_loss.3} parent=0
    #allocation2 [shape = 'u8[65536]{0}', space=vmem, size = 0x10000, scoped, tag = 'input window, operand 0, single buffered']
    #allocation3 [shape = 's32[1]{0}', space=sflag, size = 0x4, scoped, tag = 'scoped memory for nc2_loss.3']
    #allocation4 [shape = 's32[1]{0}', space=sflag, size = 0x4, scoped, tag = 'scoped memory for nc2_loss.3']
    #allocation5 [shape = 'u8[65536]{0}', space=vmem, size = 0x10000, scoped, tag = 'input window, operand 1, single buffered']
    #allocation6 [shape = 's32[1]{0}', space=sflag, size = 0x4, scoped, tag = 'scoped memory for nc2_loss.3']
    #allocation7 [shape = 'u8[512]{0}', space=vmem, size = 0x400, scoped, tag = 'output window, operand 0, single buffered']
    %7 = vsyncpa [#allocation3], 0
    %8 = vsyncpa [#allocation6], 0
    %9 = vsyncpa [#allocation4], 0
    // Predicated region
    $region2: #{nc2_loss.3} parent=1 // pred_check
      _
    $region3: #{nc2_loss.3} parent=1 // pred_check_branch
      %11 = sbr.rel (0) target = $region5
    $region4: #{nc2_loss.3} parent=1 // pred_region
      %s13 = ssub.s32 2048, 2048
      %14 = vsyncadd [#allocation3], %s13
      %s15 = sshll.u32 [#allocation2], 4
      %s16 = int_to_ptr.vmem [resolvable:$true] %s15
      %21 = dma.hbm_to_vmem [thread:$0]  %s0, 2048, %s16, [#allocation3], 128, 128, 8
    $region5: #{nc2_loss.3} parent=1 // pred_fallthru
      _
    // Predicated region
    $region6: #{nc2_loss.3} parent=1 // pred_check
      _
    $region7: #{nc2_loss.3} parent=1 // pred_check_branch
      %23 = sbr.rel (0) target = $region9
    $region8: #{nc2_loss.3} parent=1 // pred_region
      %s25 = ssub.s32 2048, 2048
      %26 = vsyncadd [#allocation6], %s25
      %s27 = sshll.u32 [#allocation5], 4
      %s28 = int_to_ptr.vmem [resolvable:$true] %s27
      %33 = dma.hbm_to_vmem [thread:$0]  %s1, 2048, %s28, [#allocation6], 128, 128, 8
    $region9: #{nc2_loss.3} parent=1 // pred_fallthru
      _
    // Predicated region
    $region10: #{nc2_loss.3} parent=1 // pred_check
      _
    $region11: #{nc2_loss.3} parent=1 // pred_check_branch
      %35 = sbr.rel (0) target = $region13
    $region12: #{nc2_loss.3} parent=1 // pred_region
      %36 = dma.done [#allocation3], 2048
    $region13: #{nc2_loss.3} parent=1 // pred_fallthru
      _
    // Predicated region
    $region14: #{nc2_loss.3} parent=1 // pred_check
      _
    $region15: #{nc2_loss.3} parent=1 // pred_check_branch
      %38 = sbr.rel (0) target = $region17
    $region16: #{nc2_loss.3} parent=1 // pred_region
      %39 = dma.done [#allocation6], 2048
    $region17: #{nc2_loss.3} parent=1 // pred_fallthru
      _
    %v40 = vld [vmem:[#allocation2] sm:$0xff]
    %v41 = vld [vmem:[#allocation2 + $0x8] sm:$0xff]
    %v42 = vld [vmem:[#allocation2 + $0x10] sm:$0xff]
    %v43 = vld [vmem:[#allocation2 + $0x18] sm:$0xff]
    %v44 = vld [vmem:[#allocation2 + $0x20] sm:$0xff]
    %v45 = vld [vmem:[#allocation2 + $0x28] sm:$0xff]
    %v46 = vld [vmem:[#allocation2 + $0x30] sm:$0xff]
    %v47 = vld [vmem:[#allocation2 + $0x38] sm:$0xff]
    %v48 = vld [vmem:[#allocation2 + $0x40] sm:$0xff]
    %v49 = vld [vmem:[#allocation2 + $0x48] sm:$0xff]
    %v50 = vld [vmem:[#allocation2 + $0x50] sm:$0xff]
    %v51 = vld [vmem:[#allocation2 + $0x58] sm:$0xff]
    %v52 = vld [vmem:[#allocation2 + $0x60] sm:$0xff]
    %v53 = vld [vmem:[#allocation2 + $0x68] sm:$0xff]
    %v54 = vld [vmem:[#allocation2 + $0x70] sm:$0xff]
    %v55 = vld [vmem:[#allocation2 + $0x78] sm:$0xff]
    %v56 = vld [vmem:[#allocation5] sm:$0xff]
    %v57 = vld [vmem:[#allocation5 + $0x8] sm:$0xff]
    %v58 = vld [vmem:[#allocation5 + $0x10] sm:$0xff]
    %v59 = vld [vmem:[#allocation5 + $0x18] sm:$0xff]
    %v60 = vld [vmem:[#allocation5 + $0x20] sm:$0xff]
    %v61 = vld [vmem:[#allocation5 + $0x28] sm:$0xff]
    %v62 = vld [vmem:[#allocation5 + $0x30] sm:$0xff]
    %v63 = vld [vmem:[#allocation5 + $0x38] sm:$0xff]
    %v64 = vld [vmem:[#allocation5 + $0x40] sm:$0xff]
    %v65 = vld [vmem:[#allocation5 + $0x48] sm:$0xff]
    %v66 = vld [vmem:[#allocation5 + $0x50] sm:$0xff]
    %v67 = vld [vmem:[#allocation5 + $0x58] sm:$0xff]
    %v68 = vld [vmem:[#allocation5 + $0x60] sm:$0xff]
    %v69 = vld [vmem:[#allocation5 + $0x68] sm:$0xff]
    %v70 = vld [vmem:[#allocation5 + $0x70] sm:$0xff]
    %v71 = vld [vmem:[#allocation5 + $0x78] sm:$0xff]
    %72 = vmatprep.subr.mxu0 0.0
    %73 = vmatpush1.xpose.msra.mxu0 %v56
    %74 = vmatprep.subr.mxu0 0.0
    %75 = vmatpush1.xpose.msra.mxu0 %v57
    %76 = vmatprep.subr.mxu0 0.0
    %77 = vmatpush1.xpose.msra.mxu0 %v58
    %78 = vmatprep.subr.mxu0 0.0
    %79 = vmatpush1.xpose.msra.mxu0 %v59
    %80 = vmatprep.subr.mxu0 0.0
    %81 = vmatpush1.xpose.msra.mxu0 %v60
    %82 = vmatprep.subr.mxu0 0.0
    %83 = vmatpush1.xpose.msra.mxu0 %v61
    %84 = vmatprep.subr.mxu0 0.0
    %85 = vmatpush1.xpose.msra.mxu0 %v62
    %86 = vmatprep.subr.mxu0 0.0
    %87 = vmatpush1.xpose.msra.mxu0 %v63
    %88 = vmatprep.subr.mxu0 0.0
    %89 = vmatpush1.xpose.msra.mxu0 %v64
    %90 = vmatprep.subr.mxu0 0.0
    %91 = vmatpush1.xpose.msra.mxu0 %v65
    %92 = vmatprep.subr.mxu0 0.0
    %93 = vmatpush1.xpose.msra.mxu0 %v66
    %94 = vmatprep.subr.mxu0 0.0
    %95 = vmatpush1.xpose.msra.mxu0 %v67
    %96 = vmatprep.subr.mxu0 0.0
    %97 = vmatpush1.xpose.msra.mxu0 %v68
    %98 = vmatprep.subr.mxu0 0.0
    %99 = vmatpush1.xpose.msra.mxu0 %v69
    %100 = vmatprep.subr.mxu0 0.0
    %101 = vmatpush1.xpose.msra.mxu0 %v70
    %102 = vmatprep.subr.mxu0 0.0
    %103 = vmatpush1.xpose.msra.mxu0 %v71
    %104 = vmatprep.subr.mxu0 0.0
    %105 = vmatpush1.xpose.msra.mxu0 0.0
    %106 = vmatprep.subr.mxu0 0.0
    %107 = vmatpush1.xpose.msra.mxu0 0.0
    %108 = vmatprep.subr.mxu0 0.0
    %109 = vmatpush1.xpose.msra.mxu0 0.0
    %110 = vmatprep.subr.mxu0 0.0
    %111 = vmatpush1.xpose.msra.mxu0 0.0
    %112 = vmatprep.subr.mxu0 0.0
    %113 = vmatpush1.xpose.msra.mxu0 0.0
    %114 = vmatprep.subr.mxu0 0.0
    %115 = vmatpush1.xpose.msra.mxu0 0.0
    %116 = vmatprep.subr.mxu0 0.0
    %117 = vmatpush1.xpose.msra.mxu0 0.0
    %118 = vmatprep.subr.mxu0 0.0
    %119 = vmatpush1.xpose.msra.mxu0 0.0
    %120 = vmatprep.subr.mxu0 0.0
    %121 = vmatpush1.xpose.msra.mxu0 0.0
    %122 = vmatprep.subr.mxu0 0.0
    %123 = vmatpush1.xpose.msra.mxu0 0.0
    %124 = vmatprep.subr.mxu0 0.0
    %125 = vmatpush1.xpose.msra.mxu0 0.0
    %126 = vmatprep.subr.mxu0 0.0
    %127 = vmatpush1.xpose.msra.mxu0 0.0
    %128 = vmatprep.subr.mxu0 0.0
    %129 = vmatpush1.xpose.msra.mxu0 0.0
    %130 = vmatprep.subr.mxu0 0.0
    %131 = vmatpush1.xpose.msra.mxu0 0.0
    %132 = vmatprep.subr.mxu0 0.0
    %133 = vmatpush1.xpose.msra.mxu0 0.0
    %134 = vmatprep.subr.mxu0 0.0
    %135 = vmatpush1.xpose.msra.mxu0 0.0
    %136 = vmatprep.mubr.f32.mxu0 0.0
    %137 = vmatmul.mubr.f32.gmra.mrb[0].mxu0 %v40
    %v138 = vpop.f32.mrb[0].mxu0
    %v139 = vadd.f32 0.0, %v138
    %v140 = vpop.f32.mrb[0].mxu0
    %141 = vmatprep.mubr.f32.mxu0 0.0
    %142 = vmatmul.mubr.f32.gmra.mrb[0].mxu0 %v41
    %v143 = vpop.f32.mrb[0].mxu0
    %v144 = vadd.f32 0.0, %v143
    %v145 = vpop.f32.mrb[0].mxu0
    %146 = vmatprep.mubr.f32.mxu0 0.0
    %147 = vmatmul.mubr.f32.gmra.mrb[0].mxu0 %v42
    %v148 = vpop.f32.mrb[0].mxu0
    %v149 = vadd.f32 0.0, %v148
    %v150 = vpop.f32.mrb[0].mxu0
    %151 = vmatprep.mubr.f32.mxu0 0.0
    %152 = vmatmul.mubr.f32.gmra.mrb[0].mxu0 %v43
    %v153 = vpop.f32.mrb[0].mxu0
    %v154 = vadd.f32 0.0, %v153
    %v155 = vpop.f32.mrb[0].mxu0
    %156 = vmatprep.mubr.f32.mxu0 0.0
    %157 = vmatmul.mubr.f32.gmra.mrb[0].mxu0 %v44
    %v158 = vpop.f32.mrb[0].mxu0
    %v159 = vadd.f32 0.0, %v158
    %v160 = vpop.f32.mrb[0].mxu0
    %161 = vmatprep.mubr.f32.mxu0 0.0
    %162 = vmatmul.mubr.f32.gmra.mrb[0].mxu0 %v45
    %v163 = vpop.f32.mrb[0].mxu0
    %v164 = vadd.f32 0.0, %v163
    %v165 = vpop.f32.mrb[0].mxu0
    %166 = vmatprep.mubr.f32.mxu0 0.0
    %167 = vmatmul.mubr.f32.gmra.mrb[0].mxu0 %v46
    %v168 = vpop.f32.mrb[0].mxu0
    %v169 = vadd.f32 0.0, %v168
    %v170 = vpop.f32.mrb[0].mxu0
    %171 = vmatprep.mubr.f32.mxu0 0.0
    %172 = vmatmul.mubr.f32.gmra.mrb[0].mxu0 %v47
    %v173 = vpop.f32.mrb[0].mxu0
    %v174 = vadd.f32 0.0, %v173
    %v175 = vpop.f32.mrb[0].mxu0
    %176 = vmatprep.mubr.f32.mxu0 0.0
    %177 = vmatmul.mubr.f32.gmra.mrb[0].mxu0 %v48
    %v178 = vpop.f32.mrb[0].mxu0
    %v179 = vadd.f32 0.0, %v178
    %v180 = vpop.f32.mrb[0].mxu0
    %181 = vmatprep.mubr.f32.mxu0 0.0
    %182 = vmatmul.mubr.f32.gmra.mrb[0].mxu0 %v49
    %v183 = vpop.f32.mrb[0].mxu0
    %v184 = vadd.f32 0.0, %v183
    %v185 = vpop.f32.mrb[0].mxu0
    %186 = vmatprep.mubr.f32.mxu0 0.0
    %187 = vmatmul.mubr.f32.gmra.mrb[0].mxu0 %v50
    %v188 = vpop.f32.mrb[0].mxu0
    %v189 = vadd.f32 0.0, %v188
    %v190 = vpop.f32.mrb[0].mxu0
    %191 = vmatprep.mubr.f32.mxu0 0.0
    %192 = vmatmul.mubr.f32.gmra.mrb[0].mxu0 %v51
    %v193 = vpop.f32.mrb[0].mxu0
    %v194 = vadd.f32 0.0, %v193
    %v195 = vpop.f32.mrb[0].mxu0
    %196 = vmatprep.mubr.f32.mxu0 0.0
    %197 = vmatmul.mubr.f32.gmra.mrb[0].mxu0 %v52
    %v198 = vpop.f32.mrb[0].mxu0
    %v199 = vadd.f32 0.0, %v198
    %v200 = vpop.f32.mrb[0].mxu0
    %201 = vmatprep.mubr.f32.mxu0 0.0
    %202 = vmatmul.mubr.f32.gmra.mrb[0].mxu0 %v53
    %v203 = vpop.f32.mrb[0].mxu0
    %v204 = vadd.f32 0.0, %v203
    %v205 = vpop.f32.mrb[0].mxu0
    %206 = vmatprep.mubr.f32.mxu0 0.0
    %207 = vmatmul.mubr.f32.gmra.mrb[0].mxu0 %v54
    %v208 = vpop.f32.mrb[0].mxu0
    %v209 = vadd.f32 0.0, %v208
    %v210 = vpop.f32.mrb[0].mxu0
    %211 = vmatprep.mubr.f32.mxu0 0.0
    %212 = vmatmul.mubr.f32.gmra.mrb[0].mxu0 %v55
    %v213 = vpop.f32.mrb[0].mxu0
    %v214 = vadd.f32 0.0, %v213
    %v215 = vpop.f32.mrb[0].mxu0
    %216 = vdwg.mxu0
    %v217 = vlaneseq
    %v218 = vshrl.u32 %v217, 7
    %v219 = vadd.s32 %v218, 8
    %v220 = vadd.s32 %v218, 16
    %v221 = vadd.s32 %v218, 24
    %v222 = vadd.s32 %v218, 32
    %v223 = vadd.s32 %v218, 40
    %v224 = vadd.s32 %v218, 48
    %v225 = vadd.s32 %v218, 56
    %v226 = vadd.s32 %v218, 64
    %v227 = vadd.s32 %v218, 72
    %v228 = vadd.s32 %v218, 80
    %v229 = vadd.s32 %v218, 88
    %v230 = vadd.s32 %v218, 96
    %v231 = vadd.s32 %v218, 104
    %v232 = vadd.s32 %v218, 112
    %v233 = vadd.s32 %v218, 120
    %s234 = smul.u32 0, 128
    %v235 = vlaneseq
    %v236 = vand.u32 %v235, 127
    %v237 = vstv %s234
    %v238 = vadd.s32 %v237, %v236
    %vm239 = vcmp.eq.s32.totalorder %v218, %v238
    %vm240 = vcmp.eq.s32.totalorder %v219, %v238
    %vm241 = vcmp.eq.s32.totalorder %v220, %v238
    %vm242 = vcmp.eq.s32.totalorder %v221, %v238
    %vm243 = vcmp.eq.s32.totalorder %v222, %v238
    %vm244 = vcmp.eq.s32.totalorder %v223, %v238
    %vm245 = vcmp.eq.s32.totalorder %v224, %v238
    %vm246 = vcmp.eq.s32.totalorder %v225, %v238
    %vm247 = vcmp.eq.s32.totalorder %v226, %v238
    %vm248 = vcmp.eq.s32.totalorder %v227, %v238
    %vm249 = vcmp.eq.s32.totalorder %v228, %v238
    %vm250 = vcmp.eq.s32.totalorder %v229, %v238
    %vm251 = vcmp.eq.s32.totalorder %v230, %v238
    %vm252 = vcmp.eq.s32.totalorder %v231, %v238
    %vm253 = vcmp.eq.s32.totalorder %v232, %v238
    %vm254 = vcmp.eq.s32.totalorder %v233, %v238
    %v255 = vsub.f32 0.0, %v139
    %v256 = vsub.f32 0.0, %v144
    %v257 = vsub.f32 0.0, %v149
    %v258 = vsub.f32 0.0, %v154
    %v259 = vsub.f32 0.0, %v159
    %v260 = vsub.f32 0.0, %v164
    %v261 = vsub.f32 0.0, %v169
    %v262 = vsub.f32 0.0, %v174
    %v263 = vsub.f32 0.0, %v179
    %v264 = vsub.f32 0.0, %v184
    %v265 = vsub.f32 0.0, %v189
    %v266 = vsub.f32 0.0, %v194
    %v267 = vsub.f32 0.0, %v199
    %v268 = vsub.f32 0.0, %v204
    %v269 = vsub.f32 0.0, %v209
    %v270 = vsub.f32 0.0, %v214
    %v271 = vsel %vm239, %v255, %v139
    %v272 = vsel %vm240, %v256, %v144
    %v273 = vsel %vm241, %v257, %v149
    %v274 = vsel %vm242, %v258, %v154
    %v275 = vsel %vm243, %v259, %v159
    %v276 = vsel %vm244, %v260, %v164
    %v277 = vsel %vm245, %v261, %v169
    %v278 = vsel %vm246, %v262, %v174
    %v279 = vsel %vm247, %v263, %v179
    %v280 = vsel %vm248, %v264, %v184
    %v281 = vsel %vm249, %v265, %v189
    %v282 = vsel %vm250, %v266, %v194
    %v283 = vsel %vm251, %v267, %v199
    %v284 = vsel %vm252, %v268, %v204
    %v285 = vsel %vm253, %v269, %v209
    %v286 = vsel %vm254, %v270, %v214
    %vm287 = vcmp.lt.s32.totalorder %v218, 8
    %vm288 = vcmp.lt.s32.totalorder %v219, 8
    %vm289 = vcmp.lt.s32.totalorder %v220, 8
    %vm290 = vcmp.lt.s32.totalorder %v221, 8
    %vm291 = vcmp.lt.s32.totalorder %v222, 8
    %vm292 = vcmp.lt.s32.totalorder %v223, 8
    %vm293 = vcmp.lt.s32.totalorder %v224, 8
    %vm294 = vcmp.lt.s32.totalorder %v225, 8
    %vm295 = vcmp.lt.s32.totalorder %v226, 8
    %vm296 = vcmp.lt.s32.totalorder %v227, 8
    %vm297 = vcmp.lt.s32.totalorder %v228, 8
    %vm298 = vcmp.lt.s32.totalorder %v229, 8
    %vm299 = vcmp.lt.s32.totalorder %v230, 8
    %vm300 = vcmp.lt.s32.totalorder %v231, 8
    %vm301 = vcmp.lt.s32.totalorder %v232, 8
    %vm302 = vcmp.lt.s32.totalorder %v233, 8
    %v303 = vsel %vm287, %v271, -2.0
    %v304 = vsel %vm288, %v272, -2.0
    %v305 = vsel %vm289, %v273, -2.0
    %v306 = vsel %vm290, %v274, -2.0
    %v307 = vsel %vm291, %v275, -2.0
    %v308 = vsel %vm292, %v276, -2.0
    %v309 = vsel %vm293, %v277, -2.0
    %v310 = vsel %vm294, %v278, -2.0
    %v311 = vsel %vm295, %v279, -2.0
    %v312 = vsel %vm296, %v280, -2.0
    %v313 = vsel %vm297, %v281, -2.0
    %v314 = vsel %vm298, %v282, -2.0
    %v315 = vsel %vm299, %v283, -2.0
    %v316 = vsel %vm300, %v284, -2.0
    %v317 = vsel %vm301, %v285, -2.0
    %v318 = vsel %vm302, %v286, -2.0
    %v319 = vmax.f32 %v303, %v307
    %v320 = vmax.f32 %v304, %v308
    %v321 = vmax.f32 %v305, %v309
    %v322 = vmax.f32 %v306, %v310
    %v323 = vmax.f32 %v319, %v311
    %v324 = vmax.f32 %v320, %v312
    %v325 = vmax.f32 %v321, %v313
    %v326 = vmax.f32 %v322, %v314
    %v327 = vmax.f32 %v323, %v315
    %v328 = vmax.f32 %v324, %v316
    %v329 = vmax.f32 %v325, %v317
    %v330 = vmax.f32 %v326, %v318
    %v331 = vmax.f32 %v327, %v328
    %v332 = vmax.f32 %v329, %v330
    %v333 = vmax.f32 %v331, %v332
    %v334 = vrot.slane %v333, 4
    %v335 = vmax.f32 %v333, %v334
    %v336 = vrot.slane %v335, 2
    %v337 = vmax.f32 %v335, %v336
    %v338 = vrot.slane %v337, 1
    %v339 = vmax.f32 %v337, %v338
    %340 = vst [vmem:[#allocation7] sm:$0x1] %v339
    // Predicated region
    $region18: #{nc2_loss.3} parent=1 // pred_check
      _
    $region19: #{nc2_loss.3} parent=1 // pred_check_branch
      %342 = sbr.rel (0) target = $region21
    $region20: #{nc2_loss.3} parent=1 // pred_region
      %s344 = ssub.s32 16, 16
      %345 = vsyncadd [#allocation4], %s344
      %s347 = sshll.u32 [#allocation7], 4
      %s348 = int_to_ptr.vmem [resolvable:$true] %s347
      %350 = dma.vmem_to_hbm [thread:$0]  %s348, 16, %s2, [#allocation4]
    $region21: #{nc2_loss.3} parent=1 // pred_fallthru
      _
    // Predicated region
    $region22: #{nc2_loss.3} parent=1 // pred_check
      _
    $region23: #{nc2_loss.3} parent=1 // pred_check_branch
      %352 = sbr.rel (0) target = $region25
    $region24: #{nc2_loss.3} parent=1 // pred_region
      %353 = dma.done [#allocation4], 16
    $region25: #{nc2_loss.3} parent=1 // pred_fallthru
      _
    %354 = vsyncpa [#allocation3], 1
    %355 = vsyncpa [#allocation6], 1
    %356 = vsyncpa [#allocation4], 1

</llo_original>
